<compile_context>
chip_gen: v7x
topology: tpu7x:2x2x1
jax: 0.10.0
libtpu: 0.0.40
codegen_flags: <defaults>
</compile_context>

<pallas_src>
import functools
import math

import jax
import jax.numpy as jnp
from jax.experimental import pallas as pl
from jax.experimental.pallas import tpu as pltpu

LN_EPS = 1e-5


def _pick_tile(dim, candidates):
    """Largest candidate tile that divides `dim`; fall back to the full dim (small shapes)."""
    for c in candidates:
        if c <= dim and dim % c == 0:
            return c
    return dim


def _bytes(shape, dtype):
    return int(math.prod(shape)) * jnp.dtype(dtype).itemsize


def _compiler_params(dimension_semantics, block_bytes, scratch_bytes=0):
    """Per-call VMEM budget: double-buffered blocks + scratch + headroom, clamped so it
    stays well under v7x's 64 MiB physical VMEM (and above scoped defaults)."""
    limit = 2 * block_bytes + scratch_bytes + (4 << 20)
    limit = min(max(limit, 8 << 20), 40 << 20)
    return pltpu.CompilerParams(
        dimension_semantics=dimension_semantics,
        vmem_limit_bytes=int(limit),
    )


# ----------------------------- tiled linear (+ optional GELU epilogue) -----------------------------

def _linear_kernel(x_ref, w_ref, b_ref, o_ref, acc_ref, *, activation):
    @pl.when(pl.program_id(2) == 0)
    def _():
        acc_ref[...] = jnp.zeros_like(acc_ref)

    acc_ref[...] += jnp.dot(x_ref[...], w_ref[...],
                            preferred_element_type=jnp.float32)

    @pl.when(pl.program_id(2) == pl.num_programs(2) - 1)
    def _():
        y = acc_ref[...] + b_ref[...]
        if activation == "gelu":
            # TODO(synk): tanh-approximate GELU (HF RoBERTa default is exact erf GELU; ~1e-3 rel diff).
            y = 0.5 * y * (1.0 + jnp.tanh(0.7978845608028654 * (y + 0.044715 * y * y * y)))
        o_ref[...] = y.astype(o_ref.dtype)


def linear(x, w, b, activation=None, out_dtype=jnp.bfloat16):
    """y = act(x @ w + b); bf16 operands, f32 accumulate, tiled pipelined grid."""
    M, K = x.shape
    N = w.shape[1]
    # tm up to 1024 cuts weight re-streaming (weights re-read M/tm times); no 384 tiles
    # (they feed the 256-wide MXU as a 256+128 split on v6e/v7x).
    tm = _pick_tile(M, (1024, 512, 256, 128))
    tn = _pick_tile(N, (512, 256, 128))
    tk = _pick_tile(K, (512, 256, 128))
    grid = (M // tm, N // tn, K // tk)

    block_bytes = (_bytes((tm, tk), x.dtype) + _bytes((tk, tn), w.dtype)
                   + _bytes((1, tn), jnp.float32) + _bytes((tm, tn), out_dtype))
    scratch_bytes = _bytes((tm, tn), jnp.float32)
    cost = pl.CostEstimate(
        flops=2 * M * N * K,
        transcendentals=M * N if activation == "gelu" else 0,
        bytes_accessed=(M * K + (M // tm) * K * N) * 2 + N * 4
        + M * N * jnp.dtype(out_dtype).itemsize,
    )
    # TODO(synk): for skinny-M calls (classifier head) a Buffered(3) weight pipeline or a
    # plain XLA dot would avoid exposed weight-streaming latency; kept uniform for simplicity.
    kern = functools.partial(_linear_kernel, activation=activation)
    return pl.pallas_call(
        kern,
        out_shape=jax.ShapeDtypeStruct((M, N), out_dtype),
        grid_spec=pltpu.PrefetchScalarGridSpec(
            num_scalar_prefetch=0,
            grid=grid,
            in_specs=[
                pl.BlockSpec((tm, tk), lambda i, j, k: (i, k)),
                pl.BlockSpec((tk, tn), lambda i, j, k: (k, j)),
                pl.BlockSpec((1, tn), lambda i, j, k: (0, j)),
            ],
            out_specs=pl.BlockSpec((tm, tn), lambda i, j, k: (i, j)),
            scratch_shapes=[pltpu.VMEM((tm, tn), jnp.float32)],
        ),
        compiler_params=_compiler_params(("parallel", "parallel", "arbitrary"),
                                         block_bytes, scratch_bytes),
        cost_estimate=cost,
    )(x, w, b.reshape(1, N).astype(jnp.float32))


# ----------------------------- tiled linear fused with residual add + LayerNorm -----------------------------

def _linear_res_ln_kernel(x_ref, w_ref, b_ref, r_ref, g_ref, beta_ref, o_ref, acc_ref):
    @pl.when(pl.program_id(1) == 0)
    def _():
        acc_ref[...] = jnp.zeros_like(acc_ref)

    acc_ref[...] += jnp.dot(x_ref[...], w_ref[...],
                            preferred_element_type=jnp.float32)

    @pl.when(pl.program_id(1) == pl.num_programs(1) - 1)
    def _():
        y = acc_ref[...] + b_ref[...] + r_ref[...].astype(jnp.float32)
        mean = jnp.mean(y, axis=-1, keepdims=True)
        c = y - mean
        var = jnp.mean(c * c, axis=-1, keepdims=True)
        o_ref[...] = (c * jax.lax.rsqrt(var + LN_EPS) * g_ref[...] + beta_ref[...]).astype(o_ref.dtype)


def linear_residual_layernorm(x, w, b, residual, gamma, beta, out_dtype=jnp.bfloat16):
    """LayerNorm(x @ w + b + residual). N kept un-tiled (LN needs the full hidden dim)."""
    M, K = x.shape
    N = w.shape[1]
    tm = _pick_tile(M, (512, 256, 128))
    tk = _pick_tile(K, (512, 256, 128))
    grid = (M // tm, K // tk)

    block_bytes = (_bytes((tm, tk), x.dtype) + _bytes((tk, N), w.dtype)
                   + 3 * _bytes((1, N), jnp.float32) + _bytes((tm, N), residual.dtype)
                   + _bytes((tm, N), out_dtype))
    scratch_bytes = _bytes((tm, N), jnp.float32)
    cost = pl.CostEstimate(
        flops=2 * M * N * K + 8 * M * N,
        transcendentals=M,  # rsqrt per row
        bytes_accessed=(M * K + (M // tm) * K * N + 2 * M * N) * 2 + 3 * N * 4,
    )
    return pl.pallas_call(
        _linear_res_ln_kernel,
        out_shape=jax.ShapeDtypeStruct((M, N), out_dtype),
        grid_spec=pltpu.PrefetchScalarGridSpec(
            num_scalar_prefetch=0,
            grid=grid,
            in_specs=[
                pl.BlockSpec((tm, tk), lambda i, k: (i, k)),
                pl.BlockSpec((tk, N), lambda i, k: (k, 0)),
                pl.BlockSpec((1, N), lambda i, k: (0, 0)),
                pl.BlockSpec((tm, N), lambda i, k: (i, 0)),
                pl.BlockSpec((1, N), lambda i, k: (0, 0)),
                pl.BlockSpec((1, N), lambda i, k: (0, 0)),
            ],
            out_specs=pl.BlockSpec((tm, N), lambda i, k: (i, 0)),
            scratch_shapes=[pltpu.VMEM((tm, N), jnp.float32)],
        ),
        compiler_params=_compiler_params(("parallel", "arbitrary"),
                                         block_bytes, scratch_bytes),
        cost_estimate=cost,
    )(x, w, b.reshape(1, N).astype(jnp.float32), residual,
      gamma.reshape(1, N).astype(jnp.float32), beta.reshape(1, N).astype(jnp.float32))


# ----------------------------- standalone LayerNorm (embeddings, no residual) -----------------------------

def _layernorm_kernel(x_ref, g_ref, b_ref, o_ref):
    x = x_ref[...].astype(jnp.float32)
    mean = jnp.mean(x, axis=-1, keepdims=True)
    c = x - mean
    var = jnp.mean(c * c, axis=-1, keepdims=True)
    o_ref[...] = (c * jax.lax.rsqrt(var + LN_EPS) * g_ref[...] + b_ref[...]).astype(o_ref.dtype)


def layernorm(x, gamma, beta, out_dtype=jnp.bfloat16):
    M, H = x.shape
    tm = _pick_tile(M, (1024, 512, 256, 128))
    grid = (M // tm,)
    block_bytes = _bytes((tm, H), x.dtype) + 2 * _bytes((1, H), jnp.float32) + _bytes((tm, H), out_dtype)
    cost = pl.CostEstimate(flops=8 * M * H, transcendentals=M,
                           bytes_accessed=M * H * 2 * 2 + 2 * H * 4)
    return pl.pallas_call(
        _layernorm_kernel,
        out_shape=jax.ShapeDtypeStruct((M, H), out_dtype),
        grid_spec=pltpu.PrefetchScalarGridSpec(
            num_scalar_prefetch=0,
            grid=grid,
            in_specs=[
                pl.BlockSpec((tm, H), lambda i: (i, 0)),
                pl.BlockSpec((1, H), lambda i: (0, 0)),
                pl.BlockSpec((1, H), lambda i: (0, 0)),
            ],
            out_specs=pl.BlockSpec((tm, H), lambda i: (i, 0)),
        ),
        compiler_params=_compiler_params(("parallel",), block_bytes),
        cost_estimate=cost,
    )(x, gamma.reshape(1, H).astype(jnp.float32), beta.reshape(1, H).astype(jnp.float32))


# ----------------------------- flash attention (online softmax, packed-head lane-dense layout) -----------------------------

def _head_group(n_heads, d_head):
    """Largest head group whose packed lane width is a multiple of 128 and <= 512 lanes;
    otherwise the smallest 128-multiple group; None -> caller slices Q/K/V explicitly."""
    ok = [h for h in range(1, n_heads + 1)
          if n_heads % h == 0 and (h * d_head) % 128 == 0]
    if not ok:
        return None
    capped = [h for h in ok if h * d_head <= 512]
    return max(capped) if capped else min(ok)


def _flash_attention_kernel(q_ref, k_ref, v_ref, bias_ref, o_ref,
                            m_sc, l_sc, acc_sc, *, d_head, heads):
    ki = pl.program_id(3)

    @pl.when(ki == 0)
    def _():
        m_sc[...] = jnp.full_like(m_sc, -jnp.inf)
        l_sc[...] = jnp.zeros_like(l_sc)
        acc_sc[...] = jnp.zeros_like(acc_sc)

    bias = bias_ref[...]                                 # (1, tkv) f32 additive padding mask

    for hh in range(heads):                              # static unroll over the packed head group
        cs = slice(hh * d_head, (hh + 1) * d_head)
        q = q_ref[:, cs]                                 # (tq, dH) bf16; 1/sqrt(dH) folded into q weights
        k = k_ref[:, cs]                                 # (tkv, dH)
        # TODO(synk): NT contraction (both operands contract on lanes); if a vxpose shows up
        # in the bundle dump, feed K pre-transposed (dH on sublanes) instead.
        s = jax.lax.dot_general(q, k, (((1,), (1,)), ((), ())),
                                preferred_element_type=jnp.float32)
        s = s + bias
        m_prev = m_sc[hh]
        m_new = jnp.maximum(m_prev, jnp.max(s, axis=-1, keepdims=True))
        alpha = jnp.exp(m_prev - m_new)
        p = jnp.exp(s - m_new)
        l_sc[hh] = alpha * l_sc[hh] + jnp.sum(p, axis=-1, keepdims=True)
        acc_sc[hh] = alpha * acc_sc[hh] + jnp.dot(
            p.astype(v_ref.dtype), v_ref[:, cs], preferred_element_type=jnp.float32)
        m_sc[hh] = m_new

    @pl.when(ki == pl.num_programs(3) - 1)
    def _():
        for hh in range(heads):
            inv = pl.reciprocal(l_sc[hh], approx=True)
            o_ref[:, hh * d_head:(hh + 1) * d_head] = (acc_sc[hh] * inv).astype(o_ref.dtype)


def flash_attention(qkv, bias, n_heads, d_head, out_dtype=jnp.bfloat16):
    """qkv: (B, S, 3H) bf16 packed [Q|K|V] along the last dim; bias: (B, 1, S) f32.
    Returns the attention context in (B, S, H) head-major layout (head h occupies columns
    h*dH:(h+1)*dH), so no XLA transpose glue is needed before/after the kernel."""
    B, S, _ = qkv.shape
    H = n_heads * d_head
    hpb = _head_group(n_heads, d_head)
    if hpb is not None:
        qa = ka = va = qkv                               # zero-copy column-sliced reads of qkv
        n_groups = n_heads // hpb
        q_base, k_base, v_base = 0, n_groups, 2 * n_groups   # column-block offsets into (.., 3H)
    else:
        # TODO(synk): tiny head dims (toy configs) cannot form 128-lane head groups; fall back
        # to explicit Q/K/V slices (one extra HBM copy each). Real RoBERTa (dH=64) takes the
        # zero-copy path above.
        hpb, n_groups = n_heads, 1
        qa, ka, va = qkv[:, :, :H], qkv[:, :, H:2 * H], qkv[:, :, 2 * H:]
        q_base = k_base = v_base = 0

    width = hpb * d_head
    tq = _pick_tile(S, (512, 256, 128))
    tkv = _pick_tile(S, (2048, 1024, 512, 256, 128))
    grid = (B, n_groups, S // tq, S // tkv)

    block_bytes = (_bytes((tq, width), qkv.dtype) + 2 * _bytes((tkv, width), qkv.dtype)
                   + _bytes((1, tkv), jnp.float32) + _bytes((tq, width), out_dtype))
    scratch_bytes = 2 * _bytes((hpb, tq, 1), jnp.float32) + _bytes((hpb, tq, d_head), jnp.float32)
    cost = pl.CostEstimate(
        flops=4 * B * n_heads * S * S * d_head,
        transcendentals=2 * B * n_heads * S * S,
        bytes_accessed=4 * B * S * H * 2 + B * S * 4,
    )
    kern = functools.partial(_flash_attention_kernel, d_head=d_head, heads=hpb)
    return pl.pallas_call(
        kern,
        out_shape=jax.ShapeDtypeStruct((B, S, H), out_dtype),
        grid_spec=pltpu.PrefetchScalarGridSpec(
            num_scalar_prefetch=0,
            grid=grid,
            in_specs=[
                pl.BlockSpec((pl.Squeezed(), tq, width),
                             lambda b, hg, qi, ki: (b, qi, q_base + hg)),
                pl.BlockSpec((pl.Squeezed(), tkv, width),
                             lambda b, hg, qi, ki: (b, ki, k_base + hg)),
                pl.BlockSpec((pl.Squeezed(), tkv, width),
                             lambda b, hg, qi, ki: (b, ki, v_base + hg)),
                pl.BlockSpec((pl.Squeezed(), 1, tkv),
                             lambda b, hg, qi, ki: (b, 0, ki)),
            ],
            out_specs=pl.BlockSpec((pl.Squeezed(), tq, width),
                                   lambda b, hg, qi, ki: (b, qi, hg)),
            scratch_shapes=[
                pltpu.VMEM((hpb, tq, 1), jnp.float32),       # running max per head
                pltpu.VMEM((hpb, tq, 1), jnp.float32),       # running denominator per head
                pltpu.VMEM((hpb, tq, d_head), jnp.float32),  # running output accumulator
            ],
        ),
        compiler_params=_compiler_params(("parallel", "parallel", "parallel", "arbitrary"),
                                         block_bytes, scratch_bytes),
        cost_estimate=cost,
    )(qa, ka, va, bias)


# ----------------------------- parameters -----------------------------

def init_params(key, cfg):
    H, I, V, L = cfg["hidden"], cfg["intermediate"], cfg["vocab"], cfg["layers"]
    keys = iter(jax.random.split(key, 4 + 16 * L))

    def norm(shape, scale=0.02):
        return (scale * jax.random.normal(next(keys), shape)).astype(jnp.float32)

    params = {
        "word_emb": norm((V, H)),
        "pos_emb": norm((cfg["max_pos"], H)),
        "type_emb": norm((1, H)),
        "emb_ln_g": jnp.ones((H,), jnp.float32),
        "emb_ln_b": jnp.zeros((H,), jnp.float32),
        "layers": [],
        "cls_w": norm((H, cfg["num_labels"])),
        "cls_b": jnp.zeros((cfg["num_labels"],), jnp.float32),
    }
    for _ in range(L):
        params["layers"].append({
            "q_w": norm((H, H)), "q_b": jnp.zeros((H,), jnp.float32),
            "k_w": norm((H, H)), "k_b": jnp.zeros((H,), jnp.float32),
            "v_w": norm((H, H)), "v_b": jnp.zeros((H,), jnp.float32),
            "o_w": norm((H, H)), "o_b": jnp.zeros((H,), jnp.float32),
            "attn_ln_g": jnp.ones((H,), jnp.float32),
            "attn_ln_b": jnp.zeros((H,), jnp.float32),
            "fi_w": norm((H, I)), "fi_b": jnp.zeros((I,), jnp.float32),
            "fo_w": norm((I, H)), "fo_b": jnp.zeros((H,), jnp.float32),
            "ffn_ln_g": jnp.ones((H,), jnp.float32),
            "ffn_ln_b": jnp.zeros((H,), jnp.float32),
        })
    return params


def prepare_params(raw, cfg):
    """Pre-fuse per-layer Q/K/V weights into one (H, 3H) matmul, fold the 1/sqrt(dH)
    attention scale into the Q projection, and cast matmul weights + embedding tables to
    bf16 (f32 accumulation happens inside the kernels)."""
    H = cfg["hidden"]
    dH = H // cfg["heads"]
    scale = 1.0 / math.sqrt(dH)
    p = {
        "word_emb": raw["word_emb"].astype(jnp.bfloat16),
        "pos_emb": raw["pos_emb"].astype(jnp.bfloat16),
        "type_emb": raw["type_emb"].astype(jnp.bfloat16),
        "emb_ln_g": raw["emb_ln_g"], "emb_ln_b": raw["emb_ln_b"],
        "cls_w": raw["cls_w"].astype(jnp.bfloat16), "cls_b": raw["cls_b"],
        "layers": [],
    }
    for l in raw["layers"]:
        # TODO(synk): on v7x the big QKV/FFN weights could be stored fp8 (per-channel scales
        # applied in the matmul epilogue) for ~2x MXU throughput; kept bf16 for accuracy parity.
        p["layers"].append({
            "qkv_w": jnp.concatenate([l["q_w"] * scale, l["k_w"], l["v_w"]],
                                     axis=1).astype(jnp.bfloat16),
            "qkv_b": jnp.concatenate([l["q_b"] * scale, l["k_b"], l["v_b"]]),
            "o_w": l["o_w"].astype(jnp.bfloat16), "o_b": l["o_b"],
            "attn_ln_g": l["attn_ln_g"], "attn_ln_b": l["attn_ln_b"],
            "fi_w": l["fi_w"].astype(jnp.bfloat16), "fi_b": l["fi_b"],
            "fo_w": l["fo_w"].astype(jnp.bfloat16), "fo_b": l["fo_b"],
            "ffn_ln_g": l["ffn_ln_g"], "ffn_ln_b": l["ffn_ln_b"],
        })
    return p


# ----------------------------- forward pass -----------------------------

def roberta_classify(params, input_ids, segment_ids, input_mask, cfg):
    del segment_ids  # reference forward() never forwards segment_ids to bert
    B, S = input_ids.shape
    H, nH = cfg["hidden"], cfg["heads"]
    dH = H // nH
    M = B * S

    # RoBERTa position ids: padding_idx offset + cumulative count of non-pad tokens.
    mask_i = (input_ids != cfg["pad_token_id"]).astype(jnp.int32)
    position_ids = jnp.cumsum(mask_i, axis=1) * mask_i + cfg["pad_token_id"]

    # TODO(synk): embedding-table gathers stay in plain JAX (data-dependent gather has no
    # clean rectangular BlockSpec); tables are bf16 so the gathers stream half the bytes.
    emb = (params["word_emb"][input_ids]
           + params["pos_emb"][position_ids]
           + params["type_emb"][0])
    x = layernorm(emb.reshape(M, H), params["emb_ln_g"], params["emb_ln_b"])   # (M, H) bf16

    # Extended attention bias: (1 - mask) * -1e4, shared across heads, kept in f32.
    bias = ((1.0 - input_mask.astype(jnp.float32)) * -10000.0)[:, None, :]     # (B, 1, S)

    for lp in params["layers"]:
        # Fused QKV projection: x read from HBM once, one kernel launch.
        qkv = linear(x, lp["qkv_w"], lp["qkv_b"])                              # (M, 3H) bf16
        # Flash attention reads Q/K/V column slices of qkv directly and writes the context
        # back in (B, S, H) head-major layout — no reshape/transpose round trips.
        ctx = flash_attention(qkv.reshape(B, S, 3 * H), bias, nH, dH)          # (B, S, H) bf16
        # Attention output projection fused with residual add + LayerNorm.
        x = linear_residual_layernorm(ctx.reshape(M, H), lp["o_w"], lp["o_b"], x,
                                      lp["attn_ln_g"], lp["attn_ln_b"])
        # FFN: intermediate matmul with GELU epilogue, output matmul fused with add+LN.
        h = linear(x, lp["fi_w"], lp["fi_b"], activation="gelu")
        x = linear_residual_layernorm(h, lp["fo_w"], lp["fo_b"], x,
                                      lp["ffn_ln_g"], lp["ffn_ln_b"])

    pooled = x.reshape(B, S, H)[:, 0]                                          # outputs[0][:, 0]
    # TODO(synk): classifier matmul is sub-vreg work (N=num_labels); a plain XLA dot would
    # avoid one tiny kernel launch. Kept in Pallas for completeness of self.classifiers.
    logits = linear(pooled, params["cls_w"], params["cls_b"], out_dtype=jnp.float32)
    return logits


# ----------------------------- main -----------------------------

if __name__ == "__main__":
    # Small config with dH = 64 so the lane-dense packed-head attention path is exercised.
    cfg = dict(vocab=100, hidden=128, heads=2, intermediate=256, layers=2,
               max_pos=64, num_labels=3, pad_token_id=1)
    key = jax.random.PRNGKey(0)
    pkey, dkey = jax.random.split(key)
    params = prepare_params(init_params(pkey, cfg), cfg)

    B, S = 2, 16
    input_ids = jax.random.randint(dkey, (B, S), 2, cfg["vocab"], dtype=jnp.int32)
    input_mask = jnp.ones((B, S), dtype=jnp.int32).at[1, 12:].set(0)   # pad tail of batch 1
    input_ids = input_ids.at[1, 12:].set(cfg["pad_token_id"])
    segment_ids = jnp.zeros((B, S), dtype=jnp.int32)

    logits = roberta_classify(params, input_ids, segment_ids, input_mask, cfg)
    jax.block_until_ready(logits)
    assert logits.shape == (B, cfg["num_labels"]) and logits.dtype == jnp.float32
    assert bool(jnp.all(jnp.isfinite(logits)))
    print("KERNEL_OK")
</pallas_src>

<mosaic_0001>
module attributes {stable_mosaic.version = 11 : i64} {
  func.func @_layernorm_kernel(%arg0: i32, %arg1: memref<32x128xbf16, #tpu.memory_space<vmem>>, %arg2: memref<1x128xf32, #tpu.memory_space<vmem>>, %arg3: memref<1x128xf32, #tpu.memory_space<vmem>>, %arg4: memref<32x128xbf16, #tpu.memory_space<vmem>>) attributes {dimension_semantics = [#tpu.dimension_semantics<parallel>], iteration_bounds = array<i64: 1>, scalar_prefetch = 0 : i64, scratch_operands = 0 : i64, tpu.core_type = #tpu.core_type<tc>, window_params = [{transform_indices = @transform_0, window_bounds = array<i64: 32, 128>}, {pipeline_mode = #tpu.pipeline_mode<synchronous>, transform_indices = @transform_1, window_bounds = array<i64: 1, 128>}, {pipeline_mode = #tpu.pipeline_mode<synchronous>, transform_indices = @transform_2, window_bounds = array<i64: 1, 128>}, {transform_indices = @transform_3, window_bounds = array<i64: 32, 128>}]} {
    %c0 = arith.constant 0 : index
    %c0_0 = arith.constant 0 : index
    %0 = vector.load %arg1[%c0, %c0_0] : memref<32x128xbf16, #tpu.memory_space<vmem>>, vector<32x128xbf16>
    %1 = arith.extf %0 : vector<32x128xbf16> to vector<32x128xf32>
    %cst = arith.constant dense<0.000000e+00> : vector<32xf32>
    %2 = vector.multi_reduction <add>, %1, %cst [1] : vector<32x128xf32> to vector<32xf32>
    %3 = vector.shape_cast %2 : vector<32xf32> to vector<32x1xf32>
    %cst_1 = arith.constant 1.280000e+02 : f32
    %4 = vector.broadcast %cst_1 : f32 to vector<32x1xf32>
    %5 = arith.divf %3, %4 : vector<32x1xf32>
    %6 = vector.broadcast %5 : vector<32x1xf32> to vector<32x128xf32>
    %7 = arith.subf %1, %6 : vector<32x128xf32>
    %8 = arith.mulf %7, %7 : vector<32x128xf32>
    %cst_2 = arith.constant dense<0.000000e+00> : vector<32xf32>
    %9 = vector.multi_reduction <add>, %8, %cst_2 [1] : vector<32x128xf32> to vector<32xf32>
    %10 = vector.shape_cast %9 : vector<32xf32> to vector<32x1xf32>
    %cst_3 = arith.constant 1.280000e+02 : f32
    %11 = vector.broadcast %cst_3 : f32 to vector<32x1xf32>
    %12 = arith.divf %10, %11 : vector<32x1xf32>
    %cst_4 = arith.constant 9.99999974E-6 : f32
    %13 = vector.broadcast %cst_4 : f32 to vector<32x1xf32>
    %14 = arith.addf %12, %13 : vector<32x1xf32>
    %15 = math.rsqrt %14 : vector<32x1xf32>
    %16 = vector.broadcast %15 : vector<32x1xf32> to vector<32x128xf32>
    %17 = arith.mulf %7, %16 : vector<32x128xf32>
    %c0_5 = arith.constant 0 : index
    %c0_6 = arith.constant 0 : index
    %18 = vector.load %arg2[%c0_5, %c0_6] : memref<1x128xf32, #tpu.memory_space<vmem>>, vector<1x128xf32>
    %19 = vector.broadcast %18 : vector<1x128xf32> to vector<32x128xf32>
    %20 = arith.mulf %17, %19 : vector<32x128xf32>
    %c0_7 = arith.constant 0 : index
    %c0_8 = arith.constant 0 : index
    %21 = vector.load %arg3[%c0_7, %c0_8] : memref<1x128xf32, #tpu.memory_space<vmem>>, vector<1x128xf32>
    %22 = vector.broadcast %21 : vector<1x128xf32> to vector<32x128xf32>
    %23 = arith.addf %20, %22 : vector<32x128xf32>
    %24 = arith.truncf %23 : vector<32x128xf32> to vector<32x128xbf16>
    %c0_9 = arith.constant 0 : index
    %c0_10 = arith.constant 0 : index
    %25 = vector.load %arg4[%c0_9, %c0_10] : memref<32x128xbf16, #tpu.memory_space<vmem>>, vector<32x128xbf16>
    tpu.vector_store %arg4[%c0_9, %c0_10], %24 {strides = array<i32>} : memref<32x128xbf16, #tpu.memory_space<vmem>>, vector<32x128xbf16>,
    return
  }
  func.func @transform_0(%arg0: i32) -> (i32, i32) {
    %c0_i32 = arith.constant 0 : i32
    %c0_i32_0 = arith.constant 0 : i32
    return %arg0, %c0_i32 : i32, i32
  }
  func.func @transform_1(%arg0: i32) -> (i32, i32) {
    %c0_i32 = arith.constant 0 : i32
    %c0_i32_0 = arith.constant 0 : i32
    %c0_i32_1 = arith.constant 0 : i32
    return %c0_i32, %c0_i32_0 : i32, i32
  }
  func.func @transform_2(%arg0: i32) -> (i32, i32) {
    %c0_i32 = arith.constant 0 : i32
    %c0_i32_0 = arith.constant 0 : i32
    %c0_i32_1 = arith.constant 0 : i32
    return %c0_i32, %c0_i32_0 : i32, i32
  }
  func.func @transform_3(%arg0: i32) -> (i32, i32) {
    %c0_i32 = arith.constant 0 : i32
    %c0_i32_0 = arith.constant 0 : i32
    return %arg0, %c0_i32 : i32, i32
  }
}

</mosaic_0001>

<llo_original>
// kernel: tpu_custom_call.1
$region0: #{tpu_custom_call.1}
  #allocation0 [shape = 'u32[]', space=smem, size = 0x4, offset = 0x4, fixed_abs, tag = 'smem constant byte address 0x4 - core index']
  #allocation1 [shape = 'u32[144,128]{1,0:T(1,128)}', space=vmem, size = 0x12000, scoped, tag = 'internal scratch']
  %s0 = inlined_call_operand.hbm [shape: bf16[32,128], index: 0, kind: input, shape index: {}]
  %s1 = inlined_call_operand.vmem [shape: f32[1,128], index: 1, kind: input, shape index: {}]
  %s2 = inlined_call_operand.vmem [shape: f32[1,128], index: 2, kind: input, shape index: {}]
  %s3 = inlined_call_operand.hbm [shape: bf16[32,128], index: 3, kind: output, shape index: {}]
  %s4 = sld [smem:[#allocation0]]
  $region26: #{tpu_custom_call.1} parent=0
    _
  %s6 = ssub.s32 1, %s4
  %s7 = scalar_select 0, %s6, %s4
  $region1: #{tpu_custom_call.1} parent=0
    #allocation2 [shape = 'u8[8192]{0}', space=vmem, size = 0x2000, scoped, tag = 'input window, operand 0, single buffered']
    #allocation3 [shape = 's32[1]{0}', space=sflag, size = 0x4, scoped, tag = 'scoped memory for tpu_custom_call.1']
    #allocation4 [shape = 's32[1]{0}', space=sflag, size = 0x4, scoped, tag = 'scoped memory for tpu_custom_call.1']
    #allocation5 [shape = 'u8[8192]{0}', space=vmem, size = 0x2000, scoped, tag = 'output window, operand 0, single buffered']
    %8 = vsyncpa [#allocation3], 0
    %9 = vsyncpa [#allocation4], 0
    // Predicated region
    $region2: #{tpu_custom_call.1} parent=1 // pred_check
      _
    $region3: #{tpu_custom_call.1} parent=1 // pred_check_branch
      %11 = sbr.rel (0) target = $region5
    $region4: #{tpu_custom_call.1} parent=1 // pred_region
      %s13 = ssub.s32 256, 256
      %14 = vsyncadd [#allocation3], %s13
      %s15 = sshll.u32 [#allocation2], 4
      %s16 = int_to_ptr.vmem [resolvable:$true] %s15
      %21 = dma.hbm_to_vmem [thread:$0]  %s0, 256, %s16, [#allocation3], 64, 64, 4
    $region5: #{tpu_custom_call.1} parent=1 // pred_fallthru
      _
    // Predicated region
    $region6: #{tpu_custom_call.1} parent=1 // pred_check
      _
    $region7: #{tpu_custom_call.1} parent=1 // pred_check_branch
      %23 = sbr.rel (0) target = $region9
    $region8: #{tpu_custom_call.1} parent=1 // pred_region
      _
    $region9: #{tpu_custom_call.1} parent=1 // pred_fallthru
      _
    // Predicated region
    $region10: #{tpu_custom_call.1} parent=1 // pred_check
      _
    $region11: #{tpu_custom_call.1} parent=1 // pred_check_branch
      %25 = sbr.rel (0) target = $region13
    $region12: #{tpu_custom_call.1} parent=1 // pred_region
      _
    $region13: #{tpu_custom_call.1} parent=1 // pred_fallthru
      _
    // Predicated region
    $region14: #{tpu_custom_call.1} parent=1 // pred_check
      _
    $region15: #{tpu_custom_call.1} parent=1 // pred_check_branch
      %27 = sbr.rel (0) target = $region17
    $region16: #{tpu_custom_call.1} parent=1 // pred_region
      %28 = dma.done [#allocation3], 256
    $region17: #{tpu_custom_call.1} parent=1 // pred_fallthru
      _
    %v29 = vld [vmem:[#allocation2] sm:$0xf]
    %v30 = vld [vmem:[#allocation2 + $0x4] sm:$0xf]
    %v31 = vld [vmem:[#allocation2 + $0x8] sm:$0xf]
    %v32 = vld [vmem:[#allocation2 + $0xc] sm:$0xf]
    %v33 = vunpack.c.l.bf16 %v29
    %v34 = vunpack.c.l.bf16 %v30
    %v35 = vunpack.c.l.bf16 %v31
    %v36 = vunpack.c.l.bf16 %v32
    %37 = vadd.xlane.f32.xlu0 %v33
    %v38 = vpop.xlane.xlu0 %37
    %39 = vadd.xlane.f32.xlu0 %v34
    %v40 = vpop.xlane.xlu0 %39
    %41 = vadd.xlane.f32.xlu0 %v35
    %v42 = vpop.xlane.xlu0 %41
    %43 = vadd.xlane.f32.xlu0 %v36
    %v44 = vpop.xlane.xlu0 %43
    %v45 = vrcp.pop 128.0
    %v46 = vmul.f32 %v38, %v45
    %v47 = vmul.f32 %v40, %v45
    %v48 = vmul.f32 %v42, %v45
    %v49 = vmul.f32 %v44, %v45
    %v50 = vsub.f32 %v33, %v46
    %v51 = vsub.f32 %v34, %v47
    %v52 = vsub.f32 %v35, %v48
    %v53 = vsub.f32 %v36, %v49
    %v54 = vmul.f32 %v50, %v50
    %v55 = vmul.f32 %v51, %v51
    %v56 = vmul.f32 %v52, %v52
    %v57 = vmul.f32 %v53, %v53
    %58 = vadd.xlane.f32.xlu0 %v54
    %v59 = vpop.xlane.xlu0 %58
    %60 = vadd.xlane.f32.xlu0 %v55
    %v61 = vpop.xlane.xlu0 %60
    %62 = vadd.xlane.f32.xlu0 %v56
    %v63 = vpop.xlane.xlu0 %62
    %64 = vadd.xlane.f32.xlu0 %v57
    %v65 = vpop.xlane.xlu0 %64
    %v66 = vmul.f32 %v59, %v45
    %v67 = vmul.f32 %v61, %v45
    %v68 = vmul.f32 %v63, %v45
    %v69 = vmul.f32 %v65, %v45
    %v70 = vadd.f32 %v66, 1e-05
    %v71 = vadd.f32 %v67, 1e-05
    %v72 = vadd.f32 %v68, 1e-05
    %v73 = vadd.f32 %v69, 1e-05
    %v74 = vrsqrt.pop %v70
    %v75 = vrsqrt.pop %v71
    %v76 = vrsqrt.pop %v72
    %v77 = vrsqrt.pop %v73
    %v78 = vmul.f32 %v50, %v74
    %v79 = vmul.f32 %v51, %v75
    %v80 = vmul.f32 %v52, %v76
    %v81 = vmul.f32 %v53, %v77
    %v82 = vld [vmem:[%s1] sm:$0x1]
    %v84 = vlaneseq
    %v85 = vshrl.u32 %v84, 7
    %v86 = vsub.s32 0, %v85
    %v87 = vrot.slane %v82, %v86
    %v89 = vmul.f32 %v78, %v87
    %v90 = vmul.f32 %v79, %v87
    %v91 = vmul.f32 %v80, %v87
    %v92 = vmul.f32 %v81, %v87
    %v93 = vld [vmem:[%s2] sm:$0x1]
    %v95 = vlaneseq
    %v96 = vshrl.u32 %v95, 7
    %v97 = vsub.s32 0, %v96
    %v98 = vrot.slane %v93, %v97
    %v100 = vadd.f32 %v89, %v98
    %v101 = vadd.f32 %v90, %v98
    %v102 = vadd.f32 %v91, %v98
    %v103 = vadd.f32 %v92, %v98
    %v104 = vpack.c.bf16 %v101, %v100
    %v105 = vpack.c.bf16 %v103, %v102
    %v108 = vunpack.c.l.b16 %v104
    %v109 = vunpack.c.h.b16 %v104
    %v110 = vunpack.c.l.b16 %v105
    %v111 = vunpack.c.h.b16 %v105
    %v112 = vpack.c.b16 %v108, %v108
    %v113 = vpack.c.b16 %v109, %v109
    %v114 = vpack.c.b16 %v110, %v110
    %v115 = vpack.c.b16 %v111, %v111
    %120 = vst [vmem:[#allocation5] sm:$0xf] %v112
    %121 = vst [vmem:[#allocation5 + $0x4] sm:$0xf] %v113
    %122 = vst [vmem:[#allocation5 + $0x8] sm:$0xf] %v114
    %123 = vst [vmem:[#allocation5 + $0xc] sm:$0xf] %v115
    // Predicated region
    $region18: #{tpu_custom_call.1} parent=1 // pred_check
      _
    $region19: #{tpu_custom_call.1} parent=1 // pred_check_branch
      %125 = sbr.rel (0) target = $region21
    $region20: #{tpu_custom_call.1} parent=1 // pred_region
      %s127 = ssub.s32 256, 256
      %128 = vsyncadd [#allocation4], %s127
      %s129 = sshll.u32 [#allocation5], 4
      %s130 = int_to_ptr.vmem [resolvable:$true] %s129
      %135 = dma.vmem_to_hbm [thread:$0]  %s130, 256, %s3, [#allocation4], 64, 64, 4
    $region21: #{tpu_custom_call.1} parent=1 // pred_fallthru
      _
    // Predicated region
    $region22: #{tpu_custom_call.1} parent=1 // pred_check
      _
    $region23: #{tpu_custom_call.1} parent=1 // pred_check_branch
      %137 = sbr.rel (0) target = $region25
    $region24: #{tpu_custom_call.1} parent=1 // pred_region
      %138 = dma.done [#allocation4], 256
    $region25: #{tpu_custom_call.1} parent=1 // pred_fallthru
      _
    %139 = vsyncpa [#allocation3], 1
    %140 = vsyncpa [#allocation4], 1

</llo_original>
